<compile_context>
chip_gen: v6e
topology: v6e:2x2x1
jax: 0.10.0
libtpu: 0.0.40
codegen_flags: <defaults>
</compile_context>

<pallas_src>
import functools

import jax
import jax.numpy as jnp
from jax.experimental import pallas as pl
from jax.experimental.pallas import tpu as pltpu

_LANE = 128  # vreg lane width (last dim)


def _round_up(n, m):
    return ((n + m - 1) // m) * m


def _sublane(dtype):
    # Native second-minor tile: 8 rows for 4-byte, 16 for 2-byte, 32 for 1-byte.
    return {4: 8, 2: 16, 1: 32}.get(jnp.dtype(dtype).itemsize, 8)


def _mlp_kernel(*refs, num_layers):
    """Fused MLP: refs = (x, w0, b0, ..., w_{L-1}, b_{L-1}, out).

    The whole layer chain is Python-unrolled (static layer count); all
    intermediates live in VMEM/vregs, only `out` is written back to HBM.
    Matmul accumulation is f32; bias + relu stay f32 on every generation.
    """
    x_ref = refs[0]
    o_ref = refs[-1]
    wb = refs[1:-1]

    h = x_ref[...]
    for li in range(num_layers):  # static unroll
        w_ref = wb[2 * li]
        b_ref = wb[2 * li + 1]
        y = jnp.dot(h.astype(w_ref.dtype), w_ref[...],
                    preferred_element_type=jnp.float32)
        y = y + b_ref[...].astype(jnp.float32)  # (tm, Dout) + (1, Dout)
        if li != num_layers - 1:
            y = jnp.maximum(y, 0.0)
        h = y
    o_ref[...] = h.astype(o_ref.dtype)


def prepare_params(params, param_dtype=None):
    """One-time parameter preparation (do NOT call per forward pass).

    * Only the FINAL layer's output dim is zero-padded to a lane multiple
      (128) so the kernel's output store is an unmasked full-width vst.
      Padding is exact: padded columns get weight 0 and bias 0.
    * Optionally casts weights/biases to `param_dtype` (bf16 recommended on
      v6e/v7x: bf16-native MXU, half the resident VMEM / HBM weight bytes).

    Returns (prepared_layers, true_out_dim).
    """
    prepared = []
    n = len(params)
    out_dim = params[-1][0].shape[1]
    for li, (w, b) in enumerate(params):
        b2 = jnp.reshape(b, (1, -1))
        if li == n - 1:
            dout_p = _round_up(w.shape[1], _LANE)
            if dout_p != w.shape[1]:
                w = jnp.zeros((w.shape[0], dout_p), w.dtype).at[:, :out_dim].set(w)
                b2 = jnp.zeros((1, dout_p), b2.dtype).at[:, :out_dim].set(b2)
        if param_dtype is not None:
            w = w.astype(param_dtype)
            b2 = b2.astype(param_dtype)
        prepared.append((w, b2))
    return prepared, out_dim


def mlp_forward(prepared_params, x, *, out_dim=None, block_b=512):
    """Fused Pallas MLP forward.

    prepared_params: output of prepare_params (weights (Din_i, Dout_i),
                     biases (1, Dout_i), final Dout lane-padded).
    x: (B, Din) activations. Returns (B, out_dim).
    """
    # TODO(synk): nonzero dropout (training mode) would need pltpu.prng_* masking.
    B, din = x.shape
    num_layers = len(prepared_params)
    dims = [din] + [w.shape[1] for (w, _) in prepared_params]
    dout_p = dims[-1]
    if out_dim is None:
        out_dim = dout_p

    itemsize = jnp.dtype(x.dtype).itemsize
    sub = _sublane(x.dtype)  # output dtype == x.dtype

    # Batch tile: big (amortize per-step overhead), sublane-aligned for dtype.
    tm = min(_round_up(block_b, sub), _round_up(B, sub))
    # v7x: ensure the "parallel" batch axis has >=2 steps so both TensorCores
    # get work (and input/output DMAs can pipeline).
    if _round_up(B, sub) >= 2 * sub and pl.cdiv(B, tm) < 2:
        tm = _round_up(pl.cdiv(B, 2), sub)

    # Per-chip VMEM budget with headroom for Mosaic's own scratch / spill.
    try:
        vmem_cap = int(pltpu.get_tpu_info().vmem_capacity_bytes)
    except Exception:
        vmem_cap = 64 * 1024 * 1024  # conservative (v7x per-TC size)
    cap = max(16 * 1024 * 1024,
              min(int(0.85 * vmem_cap), vmem_cap - 8 * 1024 * 1024))

    # Resident weights are single-buffered (Buffered(1)) -> counted once.
    weight_bytes = sum(w.size * w.dtype.itemsize + b.size * b.dtype.itemsize
                       for (w, b) in prepared_params)

    def vmem_needed(tm_):
        io = 2 * tm_ * din * itemsize + 2 * tm_ * dout_p * itemsize  # dbl-buffered x/out tiles
        act = 2 * tm_ * max(dims) * 4                                # live f32 intermediates
        return weight_bytes + io + act

    # Shrink the batch tile if the fused chain would overflow VMEM (v7x / wide layers).
    while vmem_needed(tm) > cap and tm > sub:
        tm = max(sub, _round_up(tm // 2, sub))

    b_pad = _round_up(B, tm)
    grid = (b_pad // tm,)

    # Only batch padding (cheap, rows of zeros); NO feature padding of x in HBM.
    x_p = x if b_pad == B else jnp.zeros((b_pad, din), x.dtype).at[:B].set(x)

    flat_inputs = [x_p]
    for (w, b) in prepared_params:
        flat_inputs.append(w)
        flat_inputs.append(b)

    def build_specs(buffered_weights):
        in_specs = [pl.BlockSpec((tm, din), lambda i: (i, 0))]
        for (w, b) in prepared_params:
            if buffered_weights:
                in_specs.append(pl.BlockSpec(w.shape, lambda i: (0, 0),
                                             pipeline_mode=pl.Buffered(1)))
                in_specs.append(pl.BlockSpec(b.shape, lambda i: (0, 0),
                                             pipeline_mode=pl.Buffered(1)))
            else:
                in_specs.append(pl.BlockSpec(w.shape, lambda i: (0, 0)))
                in_specs.append(pl.BlockSpec(b.shape, lambda i: (0, 0)))
        out_specs = pl.BlockSpec((tm, dout_p), lambda i: (i, 0))
        return in_specs, out_specs

    flops = 2 * b_pad * sum(di * do for di, do in zip(dims[:-1], dims[1:]))
    bytes_accessed = (x_p.size * itemsize + weight_bytes
                      + b_pad * dout_p * itemsize)
    # Margin covers the (defensive) non-Buffered fallback below as well.
    vmem_limit = int(min(cap, max(32 * 1024 * 1024,
                                  vmem_needed(tm) + weight_bytes + 4 * 1024 * 1024)))

    def run(buffered_weights):
        in_specs, out_specs = build_specs(buffered_weights)
        return pl.pallas_call(
            functools.partial(_mlp_kernel, num_layers=num_layers),
            out_shape=jax.ShapeDtypeStruct((b_pad, dout_p), x.dtype),
            grid=grid,
            in_specs=in_specs,
            out_specs=out_specs,
            compiler_params=pltpu.CompilerParams(
                dimension_semantics=("parallel",),
                vmem_limit_bytes=vmem_limit,
            ),
            cost_estimate=pl.CostEstimate(flops=flops, transcendentals=0,
                                          bytes_accessed=bytes_accessed),
        )(*flat_inputs)

    try:
        out_p = run(buffered_weights=True)
    except Exception:
        # Defensive fallback (identical semantics): drop the single-buffering
        # hint for grid-resident weights if this JAX/Mosaic build rejects it.
        out_p = run(buffered_weights=False)

    # Strip batch / output-lane padding.
    return out_p[:B, :out_dim]


def init_mlp_params(key, input_dim, hidden_dims, output_dim, dtype=jnp.float32):
    """Deterministic init mimicking nn.Linear shapes.

    PyTorch nn.Linear(in, out) holds weight (out, in) and bias (out,);
    we store the weight transposed as (in, out) for the MXU-friendly layout.
    """
    params = []
    dims = [input_dim] + list(hidden_dims) + [output_dim]
    for d_in, d_out in zip(dims[:-1], dims[1:]):
        key, kw, kb = jax.random.split(key, 3)
        bound = 1.0 / jnp.sqrt(jnp.asarray(d_in, dtype))
        w = jax.random.uniform(kw, (d_in, d_out), dtype, -bound, bound)
        b = jax.random.uniform(kb, (1, d_out), dtype, -bound, bound)
        params.append((w, b))
    return params


def mlp_reference(params, x):
    """Pure-JAX reference (f32) for correctness checking."""
    n = len(params)
    for li, (w, b) in enumerate(params):
        x = x @ w + b.reshape(1, -1)
        if li != n - 1:
            x = jnp.maximum(x, 0.0)
    return x


if __name__ == "__main__":
    key = jax.random.PRNGKey(0)
    k_params, k_x1, k_x2 = jax.random.split(key, 3)

    input_dim = 16
    hidden_dims = [32, 32]
    output_dim = 8
    raw_params = init_mlp_params(k_params, input_dim, hidden_dims, output_dim)

    # One-time parameter preparation (padding/casting hoisted out of forward).
    prep_f32, out_dim = prepare_params(raw_params)
    prep_bf16, _ = prepare_params(raw_params, param_dtype=jnp.bfloat16)

    # Case 1: small batch, single grid step, f32 weights (tight tolerance).
    batch = 8
    x = jax.random.normal(k_x1, (batch, input_dim), jnp.float32)
    out = jax.block_until_ready(mlp_forward(prep_f32, x, out_dim=out_dim))
    ref = mlp_reference(raw_params, x)
    assert out.shape == (batch, output_dim)
    assert jnp.allclose(out, ref, atol=1e-4, rtol=1e-4)

    # Case 2: ragged batch, multi-step "parallel" grid with batch padding.
    batch2 = 50
    x2 = jax.random.normal(k_x2, (batch2, input_dim), jnp.float32)
    out2 = jax.block_until_ready(mlp_forward(prep_f32, x2, out_dim=out_dim, block_b=16))
    ref2 = mlp_reference(raw_params, x2)
    assert out2.shape == (batch2, output_dim)
    assert jnp.allclose(out2, ref2, atol=1e-4, rtol=1e-4)

    # Case 3: bf16 weights (bf16-native MXU path on v5e/v6e/v7x); also exercises
    # the >=2-step grid split. Looser tolerance for bf16 matmul rounding.
    out3 = jax.block_until_ready(mlp_forward(prep_bf16, x2, out_dim=out_dim))
    assert out3.shape == (batch2, output_dim)
    assert jnp.allclose(out3, ref2, atol=5e-2, rtol=5e-2)

    print("KERNEL_OK")
</pallas_src>

<mosaic_0001>
module attributes {stable_mosaic.version = 11 : i64} {
  func.func @_mlp_kernel(%arg0: i32, %arg1: memref<8x16xf32, #tpu.memory_space<vmem>>, %arg2: memref<16x32xf32, #tpu.memory_space<vmem>>, %arg3: memref<1x32xf32, #tpu.memory_space<vmem>>, %arg4: memref<32x32xf32, #tpu.memory_space<vmem>>, %arg5: memref<1x32xf32, #tpu.memory_space<vmem>>, %arg6: memref<32x128xf32, #tpu.memory_space<vmem>>, %arg7: memref<1x128xf32, #tpu.memory_space<vmem>>, %arg8: memref<8x128xf32, #tpu.memory_space<vmem>>) attributes {dimension_semantics = [#tpu.dimension_semantics<parallel>], iteration_bounds = array<i64: 1>, scalar_prefetch = 0 : i64, scratch_operands = 0 : i64, tpu.core_type = #tpu.core_type<tc>, window_params = [{transform_indices = @transform_0, window_bounds = array<i64: 8, 16>}, {pipeline_mode = #tpu.pipeline_mode<synchronous>, transform_indices = @transform_1, window_bounds = array<i64: 16, 32>}, {pipeline_mode = #tpu.pipeline_mode<synchronous>, transform_indices = @transform_2, window_bounds = array<i64: 1, 32>}, {pipeline_mode = #tpu.pipeline_mode<synchronous>, transform_indices = @transform_3, window_bounds = array<i64: 32, 32>}, {pipeline_mode = #tpu.pipeline_mode<synchronous>, transform_indices = @transform_4, window_bounds = array<i64: 1, 32>}, {pipeline_mode = #tpu.pipeline_mode<synchronous>, transform_indices = @transform_5, window_bounds = array<i64: 32, 128>}, {pipeline_mode = #tpu.pipeline_mode<synchronous>, transform_indices = @transform_6, window_bounds = array<i64: 1, 128>}, {transform_indices = @transform_7, window_bounds = array<i64: 8, 128>}]} {
    %c0 = arith.constant 0 : index
    %c0_0 = arith.constant 0 : index
    %0 = vector.load %arg1[%c0, %c0_0] : memref<8x16xf32, #tpu.memory_space<vmem>>, vector<8x16xf32>
    %c0_1 = arith.constant 0 : index
    %c0_2 = arith.constant 0 : index
    %1 = vector.load %arg2[%c0_1, %c0_2] : memref<16x32xf32, #tpu.memory_space<vmem>>, vector<16x32xf32>
    %cst = arith.constant dense<0.000000e+00> : vector<8x32xf32>
    %2 = tpu.matmul %0, %1, %cst {dimension_numbers = #tpu.dot_dimension_numbers<[1], [0], [0], [1], [0, 0, 1, 1], [], []>} : vector<8x16xf32>, vector<16x32xf32>, vector<8x32xf32> -> vector<8x32xf32>
    %c0_3 = arith.constant 0 : index
    %c0_4 = arith.constant 0 : index
    %3 = vector.load %arg3[%c0_3, %c0_4] : memref<1x32xf32, #tpu.memory_space<vmem>>, vector<1x32xf32>
    %4 = vector.broadcast %3 : vector<1x32xf32> to vector<8x32xf32>
    %5 = arith.addf %2, %4 : vector<8x32xf32>
    %cst_5 = arith.constant 0.000000e+00 : f32
    %6 = vector.broadcast %cst_5 : f32 to vector<8x32xf32>
    %7 = arith.maximumf %5, %6 : vector<8x32xf32>
    %c0_6 = arith.constant 0 : index
    %c0_7 = arith.constant 0 : index
    %8 = vector.load %arg4[%c0_6, %c0_7] : memref<32x32xf32, #tpu.memory_space<vmem>>, vector<32x32xf32>
    %cst_8 = arith.constant dense<0.000000e+00> : vector<8x32xf32>
    %9 = tpu.matmul %7, %8, %cst_8 {dimension_numbers = #tpu.dot_dimension_numbers<[1], [0], [0], [1], [0, 0, 1, 1], [], []>} : vector<8x32xf32>, vector<32x32xf32>, vector<8x32xf32> -> vector<8x32xf32>
    %c0_9 = arith.constant 0 : index
    %c0_10 = arith.constant 0 : index
    %10 = vector.load %arg5[%c0_9, %c0_10] : memref<1x32xf32, #tpu.memory_space<vmem>>, vector<1x32xf32>
    %11 = vector.broadcast %10 : vector<1x32xf32> to vector<8x32xf32>
    %12 = arith.addf %9, %11 : vector<8x32xf32>
    %cst_11 = arith.constant 0.000000e+00 : f32
    %13 = vector.broadcast %cst_11 : f32 to vector<8x32xf32>
    %14 = arith.maximumf %12, %13 : vector<8x32xf32>
    %c0_12 = arith.constant 0 : index
    %c0_13 = arith.constant 0 : index
    %15 = vector.load %arg6[%c0_12, %c0_13] : memref<32x128xf32, #tpu.memory_space<vmem>>, vector<32x128xf32>
    %cst_14 = arith.constant dense<0.000000e+00> : vector<8x128xf32>
    %16 = tpu.matmul %14, %15, %cst_14 {dimension_numbers = #tpu.dot_dimension_numbers<[1], [0], [0], [1], [0, 0, 1, 1], [], []>} : vector<8x32xf32>, vector<32x128xf32>, vector<8x128xf32> -> vector<8x128xf32>
    %c0_15 = arith.constant 0 : index
    %c0_16 = arith.constant 0 : index
    %17 = vector.load %arg7[%c0_15, %c0_16] : memref<1x128xf32, #tpu.memory_space<vmem>>, vector<1x128xf32>
    %18 = vector.broadcast %17 : vector<1x128xf32> to vector<8x128xf32>
    %19 = arith.addf %16, %18 : vector<8x128xf32>
    %c0_17 = arith.constant 0 : index
    %c0_18 = arith.constant 0 : index
    %20 = vector.load %arg8[%c0_17, %c0_18] : memref<8x128xf32, #tpu.memory_space<vmem>>, vector<8x128xf32>
    tpu.vector_store %arg8[%c0_17, %c0_18], %19 {strides = array<i32>} : memref<8x128xf32, #tpu.memory_space<vmem>>, vector<8x128xf32>,
    return
  }
  func.func @transform_0(%arg0: i32) -> (i32, i32) {
    %c0_i32 = arith.constant 0 : i32
    %c0_i32_0 = arith.constant 0 : i32
    return %arg0, %c0_i32 : i32, i32
  }
  func.func @transform_1(%arg0: i32) -> (i32, i32) {
    %c0_i32 = arith.constant 0 : i32
    %c0_i32_0 = arith.constant 0 : i32
    %c0_i32_1 = arith.constant 0 : i32
    return %c0_i32, %c0_i32_0 : i32, i32
  }
  func.func @transform_2(%arg0: i32) -> (i32, i32) {
    %c0_i32 = arith.constant 0 : i32
    %c0_i32_0 = arith.constant 0 : i32
    %c0_i32_1 = arith.constant 0 : i32
    return %c0_i32, %c0_i32_0 : i32, i32
  }
  func.func @transform_3(%arg0: i32) -> (i32, i32) {
    %c0_i32 = arith.constant 0 : i32
    %c0_i32_0 = arith.constant 0 : i32
    %c0_i32_1 = arith.constant 0 : i32
    return %c0_i32, %c0_i32_0 : i32, i32
  }
  func.func @transform_4(%arg0: i32) -> (i32, i32) {
    %c0_i32 = arith.constant 0 : i32
    %c0_i32_0 = arith.constant 0 : i32
    %c0_i32_1 = arith.constant 0 : i32
    return %c0_i32, %c0_i32_0 : i32, i32
  }
  func.func @transform_5(%arg0: i32) -> (i32, i32) {
    %c0_i32 = arith.constant 0 : i32
    %c0_i32_0 = arith.constant 0 : i32
    %c0_i32_1 = arith.constant 0 : i32
    return %c0_i32, %c0_i32_0 : i32, i32
  }
  func.func @transform_6(%arg0: i32) -> (i32, i32) {
    %c0_i32 = arith.constant 0 : i32
    %c0_i32_0 = arith.constant 0 : i32
    %c0_i32_1 = arith.constant 0 : i32
    return %c0_i32, %c0_i32_0 : i32, i32
  }
  func.func @transform_7(%arg0: i32) -> (i32, i32) {
    %c0_i32 = arith.constant 0 : i32
    %c0_i32_0 = arith.constant 0 : i32
    return %arg0, %c0_i32 : i32, i32
  }
}

module attributes {stable_mosaic.version = 11 : i64} {
  func.func @_mlp_kernel(%arg0: i32, %arg1: memref<8x16xf32, #tpu.memory_space<vmem>>, %arg2: memref<16x32xf32, #tpu.memory_space<vmem>>, %arg3: memref<1x32xf32, #tpu.memory_space<vmem>>, %arg4: memref<32x32xf32, #tpu.memory_space<vmem>>, %arg5: memref<1x32xf32, #tpu.memory_space<vmem>>, %arg6: memref<32x128xf32, #tpu.memory_space<vmem>>, %arg7: memref<1x128xf32, #tpu.memory_space<vmem>>, %arg8: memref<8x128xf32, #tpu.memory_space<vmem>>) attributes {dimension_semantics = [#tpu.dimension_semantics<parallel>], iteration_bounds = array<i64: 1>, scalar_prefetch = 0 : i64, scratch_operands = 0 : i64, tpu.core_type = #tpu.core_type<tc>, window_params = [{transform_indices = @transform_0, window_bounds = array<i64: 8, 16>}, {pipeline_mode = #tpu.pipeline_mode<synchronous>, transform_indices = @transform_1, window_bounds = array<i64: 16, 32>}, {pipeline_mode = #tpu.pipeline_mode<synchronous>, transform_indices = @transform_2, window_bounds = array<i64: 1, 32>}, {pipeline_mode = #tpu.pipeline_mode<synchronous>, transform_indices = @transform_3, window_bounds = array<i64: 32, 32>}, {pipeline_mode = #tpu.pipeline_mode<synchronous>, transform_indices = @transform_4, window_bounds = array<i64: 1, 32>}, {pipeline_mode = #tpu.pipeline_mode<synchronous>, transform_indices = @transform_5, window_bounds = array<i64: 32, 128>}, {pipeline_mode = #tpu.pipeline_mode<synchronous>, transform_indices = @transform_6, window_bounds = array<i64: 1, 128>}, {transform_indices = @transform_7, window_bounds = array<i64: 8, 128>}]} {
    %c0 = arith.constant 0 : index
    %c0_0 = arith.constant 0 : index
    %0 = vector.load %arg1[%c0, %c0_0] : memref<8x16xf32, #tpu.memory_space<vmem>>, vector<8x16xf32>
    %c0_1 = arith.constant 0 : index
    %c0_2 = arith.constant 0 : index
    %1 = vector.load %arg2[%c0_1, %c0_2] : memref<16x32xf32, #tpu.memory_space<vmem>>, vector<16x32xf32>
    %cst = arith.constant dense<0.000000e+00> : vector<8x32xf32>
    %2 = tpu.matmul %0, %1, %cst {dimension_numbers = #tpu.dot_dimension_numbers<[1], [0], [0], [1], [0, 0, 1, 1], [], []>} : vector<8x16xf32>, vector<16x32xf32>, vector<8x32xf32> -> vector<8x32xf32>
    %c0_3 = arith.constant 0 : index
    %c0_4 = arith.constant 0 : index
    %3 = vector.load %arg3[%c0_3, %c0_4] : memref<1x32xf32, #tpu.memory_space<vmem>>, vector<1x32xf32>
    %4 = vector.broadcast %3 : vector<1x32xf32> to vector<8x32xf32>
    %5 = arith.addf %2, %4 : vector<8x32xf32>
    %cst_5 = arith.constant 0.000000e+00 : f32
    %6 = vector.broadcast %cst_5 : f32 to vector<8x32xf32>
    %7 = arith.maximumf %5, %6 : vector<8x32xf32>
    %c0_6 = arith.constant 0 : index
    %c0_7 = arith.constant 0 : index
    %8 = vector.load %arg4[%c0_6, %c0_7] : memref<32x32xf32, #tpu.memory_space<vmem>>, vector<32x32xf32>
    %cst_8 = arith.constant dense<0.000000e+00> : vector<8x32xf32>
    %9 = tpu.matmul %7, %8, %cst_8 {dimension_numbers = #tpu.dot_dimension_numbers<[1], [0], [0], [1], [0, 0, 1, 1], [], []>} : vector<8x32xf32>, vector<32x32xf32>, vector<8x32xf32> -> vector<8x32xf32>
    %c0_9 = arith.constant 0 : index
    %c0_10 = arith.constant 0 : index
    %10 = vector.load %arg5[%c0_9, %c0_10] : memref<1x32xf32, #tpu.memory_space<vmem>>, vector<1x32xf32>
    %11 = vector.broadcast %10 : vector<1x32xf32> to vector<8x32xf32>
    %12 = arith.addf %9, %11 : vector<8x32xf32>
    %cst_11 = arith.constant 0.000000e+00 : f32
    %13 = vector.broadcast %cst_11 : f32 to vector<8x32xf32>
    %14 = arith.maximumf %12, %13 : vector<8x32xf32>
    %c0_12 = arith.constant 0 : index
    %c0_13 = arith.constant 0 : index
    %15 = vector.load %arg6[%c0_12, %c0_13] : memref<32x128xf32, #tpu.memory_space<vmem>>, vector<32x128xf32>
    %cst_14 = arith.constant dense<0.000000e+00> : vector<8x128xf32>
    %16 = tpu.matmul %14, %15, %cst_14 {dimension_numbers = #tpu.dot_dimension_numbers<[1], [0], [0], [1], [0, 0, 1, 1], [], []>} : vector<8x32xf32>, vector<32x128xf32>, vector<8x128xf32> -> vector<8x128xf32>
    %c0_15 = arith.constant 0 : index
    %c0_16 = arith.constant 0 : index
    %17 = vector.load %arg7[%c0_15, %c0_16] : memref<1x128xf32, #tpu.memory_space<vmem>>, vector<1x128xf32>
    %18 = vector.broadcast %17 : vector<1x128xf32> to vector<8x128xf32>
    %19 = arith.addf %16, %18 : vector<8x128xf32>
    %c0_17 = arith.constant 0 : index
    %c0_18 = arith.constant 0 : index
    %20 = vector.load %arg8[%c0_17, %c0_18] : memref<8x128xf32, #tpu.memory_space<vmem>>, vector<8x128xf32>
    tpu.vector_store %arg8[%c0_17, %c0_18], %19 {strides = array<i32>} : memref<8x128xf32, #tpu.memory_space<vmem>>, vector<8x128xf32>,
    return
  }
  func.func @transform_0(%arg0: i32) -> (i32, i32) {
    %c0_i32 = arith.constant 0 : i32
    %c0_i32_0 = arith.constant 0 : i32
    return %arg0, %c0_i32 : i32, i32
  }
  func.func @transform_1(%arg0: i32) -> (i32, i32) {
    %c0_i32 = arith.constant 0 : i32
    %c0_i32_0 = arith.constant 0 : i32
    %c0_i32_1 = arith.constant 0 : i32
    return %c0_i32, %c0_i32_0 : i32, i32
  }
  func.func @transform_2(%arg0: i32) -> (i32, i32) {
    %c0_i32 = arith.constant 0 : i32
    %c0_i32_0 = arith.constant 0 : i32
    %c0_i32_1 = arith.constant 0 : i32
    return %c0_i32, %c0_i32_0 : i32, i32
  }
  func.func @transform_3(%arg0: i32) -> (i32, i32) {
    %c0_i32 = arith.constant 0 : i32
    %c0_i32_0 = arith.constant 0 : i32
    %c0_i32_1 = arith.constant 0 : i32
    return %c0_i32, %c0_i32_0 : i32, i32
  }
  func.func @transform_4(%arg0: i32) -> (i32, i32) {
    %c0_i32 = arith.constant 0 : i32
    %c0_i32_0 = arith.constant 0 : i32
    %c0_i32_1 = arith.constant 0 : i32
    return %c0_i32, %c0_i32_0 : i32, i32
  }
  func.func @transform_5(%arg0: i32) -> (i32, i32) {
    %c0_i32 = arith.constant 0 : i32
    %c0_i32_0 = arith.constant 0 : i32
    %c0_i32_1 = arith.constant 0 : i32
    return %c0_i32, %c0_i32_0 : i32, i32
  }
  func.func @transform_6(%arg0: i32) -> (i32, i32) {
    %c0_i32 = arith.constant 0 : i32
    %c0_i32_0 = arith.constant 0 : i32
    %c0_i32_1 = arith.constant 0 : i32
    return %c0_i32, %c0_i32_0 : i32, i32
  }
  func.func @transform_7(%arg0: i32) -> (i32, i32) {
    %c0_i32 = arith.constant 0 : i32
    %c0_i32_0 = arith.constant 0 : i32
    return %arg0, %c0_i32 : i32, i32
  }
}

</mosaic_0001>

<llo_original>
// kernel: tpu_custom_call.1
$region0: #{tpu_custom_call.1}
  #allocation0 [shape = 'u32[]', space=smem, size = 0x4, offset = 0x4, fixed_abs, tag = 'smem constant byte address 0x4 - core index']
  #allocation1 [shape = 'u32[144,128]{1,0:T(1,128)}', space=vmem, size = 0x12000, scoped, tag = 'internal scratch']
  %s0 = inlined_call_operand.hbm [shape: f32[8,16], index: 0, kind: input, shape index: {}]
  %s1 = inlined_call_operand.hbm [shape: f32[16,32], index: 1, kind: input, shape index: {}]
  %s2 = inlined_call_operand.vmem [shape: f32[1,32], index: 2, kind: input, shape index: {}]
  %s3 = inlined_call_operand.hbm [shape: f32[32,32], index: 3, kind: input, shape index: {}]
  %s4 = inlined_call_operand.vmem [shape: f32[1,32], index: 4, kind: input, shape index: {}]
  %s5 = inlined_call_operand.hbm [shape: f32[32,128], index: 5, kind: input, shape index: {}]
  %s6 = inlined_call_operand.vmem [shape: f32[1,128], index: 6, kind: input, shape index: {}]
  %s7 = inlined_call_operand.hbm [shape: f32[8,128], index: 7, kind: output, shape index: {}]
  %s8 = sld [smem:[#allocation0]]
  $region54: #{tpu_custom_call.1} parent=0
    _
  %s10 = ssub.s32 1, %s8
  %s11 = scalar_select 0, %s10, %s8
  $region1: #{tpu_custom_call.1} parent=0
    #allocation2 [shape = 'u8[4096]{0}', space=vmem, size = 0x1000, scoped, tag = 'input window, operand 0, single buffered']
    #allocation3 [shape = 's32[1]{0}', space=sflag, size = 0x4, scoped, tag = 'scoped memory for tpu_custom_call.1']
    #allocation4 [shape = 's32[1]{0}', space=sflag, size = 0x4, scoped, tag = 'scoped memory for tpu_custom_call.1']
    #allocation5 [shape = 'u8[8192]{0}', space=vmem, size = 0x2000, scoped, tag = 'input window, operand 1, single buffered']
    #allocation6 [shape = 's32[1]{0}', space=sflag, size = 0x4, scoped, tag = 'scoped memory for tpu_custom_call.1']
    #allocation7 [shape = 'u8[16384]{0}', space=vmem, size = 0x4000, scoped, tag = 'input window, operand 3, single buffered']
    #allocation8 [shape = 'u8[16384]{0}', space=vmem, size = 0x4000, scoped, tag = 'input window, operand 5, single buffered']
    #allocation9 [shape = 's32[1]{0}', space=sflag, size = 0x4, scoped, tag = 'scoped memory for tpu_custom_call.1']
    #allocation10 [shape = 'u8[4096]{0}', space=vmem, size = 0x1000, scoped, tag = 'output window, operand 0, single buffered']
    %12 = vsyncpa [#allocation3], 0
    %13 = vsyncpa [#allocation6], 0
    %14 = vsyncpa [#allocation9], 0
    %15 = vsyncpa [#allocation4], 0
    // Predicated region
    $region2: #{tpu_custom_call.1} parent=1 // pred_check
      _
    $region3: #{tpu_custom_call.1} parent=1 // pred_check_branch
      %17 = sbr.rel (0) target = $region5
    $region4: #{tpu_custom_call.1} parent=1 // pred_region
      %s19 = ssub.s32 128, 128
      %20 = vsyncadd [#allocation3], %s19
      %s22 = sshll.u32 [#allocation2], 4
      %s23 = int_to_ptr.vmem [resolvable:$true] %s22
      %25 = dma.hbm_to_vmem [thread:$0]  %s0, 128, %s23, [#allocation3]
    $region5: #{tpu_custom_call.1} parent=1 // pred_fallthru
      _
    // Predicated region
    $region6: #{tpu_custom_call.1} parent=1 // pred_check
      _
    $region7: #{tpu_custom_call.1} parent=1 // pred_check_branch
      %27 = sbr.rel (0) target = $region9
    $region8: #{tpu_custom_call.1} parent=1 // pred_region
      %s29 = ssub.s32 256, 256
      %30 = vsyncadd [#allocation6], %s29
      %s31 = sshll.u32 [#allocation5], 4
      %s32 = int_to_ptr.vmem [resolvable:$true] %s31
      %37 = dma.hbm_to_vmem [thread:$0]  %s1, 256, %s32, [#allocation6], 128, 128, 8
    $region9: #{tpu_custom_call.1} parent=1 // pred_fallthru
      _
    // Predicated region
    $region10: #{tpu_custom_call.1} parent=1 // pred_check
      _
    $region11: #{tpu_custom_call.1} parent=1 // pred_check_branch
      %39 = sbr.rel (0) target = $region13
    $region12: #{tpu_custom_call.1} parent=1 // pred_region
      _
    $region13: #{tpu_custom_call.1} parent=1 // pred_fallthru
      _
    // Predicated region
    $region14: #{tpu_custom_call.1} parent=1 // pred_check
      _
    $region15: #{tpu_custom_call.1} parent=1 // pred_check_branch
      %41 = sbr.rel (0) target = $region17
    $region16: #{tpu_custom_call.1} parent=1 // pred_region
      %s43 = ssub.s32 512, 512
      %44 = vsyncadd [#allocation6], %s43
      %s45 = sshll.u32 [#allocation7], 4
      %s46 = int_to_ptr.vmem [resolvable:$true] %s45
      %51 = dma.hbm_to_vmem [thread:$0]  %s3, 512, %s46, [#allocation6], 128, 128, 8
    $region17: #{tpu_custom_call.1} parent=1 // pred_fallthru
      _
    // Predicated region
    $region18: #{tpu_custom_call.1} parent=1 // pred_check
      _
    $region19: #{tpu_custom_call.1} parent=1 // pred_check_branch
      %53 = sbr.rel (0) target = $region21
    $region20: #{tpu_custom_call.1} parent=1 // pred_region
      _
    $region21: #{tpu_custom_call.1} parent=1 // pred_fallthru
      _
    // Predicated region
    $region22: #{tpu_custom_call.1} parent=1 // pred_check
      _
    $region23: #{tpu_custom_call.1} parent=1 // pred_check_branch
      %55 = sbr.rel (0) target = $region25
    $region24: #{tpu_custom_call.1} parent=1 // pred_region
      %s57 = ssub.s32 512, 512
      %58 = vsyncadd [#allocation9], %s57
      %s59 = sshll.u32 [#allocation8], 4
      %s60 = int_to_ptr.vmem [resolvable:$true] %s59
      %65 = dma.hbm_to_vmem [thread:$0]  %s5, 512, %s60, [#allocation9], 128, 128, 8
    $region25: #{tpu_custom_call.1} parent=1 // pred_fallthru
      _
    // Predicated region
    $region26: #{tpu_custom_call.1} parent=1 // pred_check
      _
    $region27: #{tpu_custom_call.1} parent=1 // pred_check_branch
      %67 = sbr.rel (0) target = $region29
    $region28: #{tpu_custom_call.1} parent=1 // pred_region
      _
    $region29: #{tpu_custom_call.1} parent=1 // pred_fallthru
      _
    // Predicated region
    $region30: #{tpu_custom_call.1} parent=1 // pred_check
      _
    $region31: #{tpu_custom_call.1} parent=1 // pred_check_branch
      %69 = sbr.rel (0) target = $region33
    $region32: #{tpu_custom_call.1} parent=1 // pred_region
      %70 = dma.done [#allocation3], 128
    $region33: #{tpu_custom_call.1} parent=1 // pred_fallthru
      _
    // Predicated region
    $region34: #{tpu_custom_call.1} parent=1 // pred_check
      _
    $region35: #{tpu_custom_call.1} parent=1 // pred_check_branch
      %72 = sbr.rel (0) target = $region37
    $region36: #{tpu_custom_call.1} parent=1 // pred_region
      %73 = dma.done [#allocation6], 256
    $region37: #{tpu_custom_call.1} parent=1 // pred_fallthru
      _
    // Predicated region
    $region38: #{tpu_custom_call.1} parent=1 // pred_check
      _
    $region39: #{tpu_custom_call.1} parent=1 // pred_check_branch
      %75 = sbr.rel (0) target = $region41
    $region40: #{tpu_custom_call.1} parent=1 // pred_region
      %76 = dma.done [#allocation6], 512
    $region41: #{tpu_custom_call.1} parent=1 // pred_fallthru
      _
    // Predicated region
    $region42: #{tpu_custom_call.1} parent=1 // pred_check
      _
    $region43: #{tpu_custom_call.1} parent=1 // pred_check_branch
      %78 = sbr.rel (0) target = $region45
    $region44: #{tpu_custom_call.1} parent=1 // pred_region
      %79 = dma.done [#allocation9], 512
    $region45: #{tpu_custom_call.1} parent=1 // pred_fallthru
      _
    %v80 = vld [vmem:[#allocation2] sm:$0xff]
    %v81 = vld [vmem:[#allocation5] sm:$0xff]
    %v82 = vld [vmem:[#allocation5 + $0x8] sm:$0xff]
    %v83 = vld [vmem:[%s2] sm:$0x1]
    %v85 = vlaneseq
    %v86 = vshrl.u32 %v85, 7
    %v87 = vsub.s32 0, %v86
    %v88 = vrot.slane %v83, %v87
    %vm90 = vcmask 130048
    %v92 = vsel %vm90, %v80, 0
    %94 = vmatprep.subr.mxu0 0.0
    %95 = vmatpush1.msra.mxu0 0.0
    %96 = vmatprep.subr.mxu0 0.0
    %97 = vmatpush1.msra.mxu0 0.0
    %98 = vmatprep.subr.mxu0 0.0
    %99 = vmatpush1.msra.mxu0 0.0
    %100 = vmatprep.subr.mxu0 0.0
    %101 = vmatpush1.msra.mxu0 0.0
    %102 = vmatprep.subr.mxu0 0.0
    %103 = vmatpush1.msra.mxu0 0.0
    %104 = vmatprep.subr.mxu0 0.0
    %105 = vmatpush1.msra.mxu0 0.0
    %106 = vmatprep.subr.mxu0 0.0
    %107 = vmatpush1.msra.mxu0 0.0
    %108 = vmatprep.subr.mxu0 0.0
    %109 = vmatpush1.msra.mxu0 0.0
    %110 = vmatprep.subr.mxu0 0.0
    %111 = vmatpush1.msra.mxu0 0.0
    %112 = vmatprep.subr.mxu0 0.0
    %113 = vmatpush1.msra.mxu0 0.0
    %114 = vmatprep.subr.mxu0 0.0
    %115 = vmatpush1.msra.mxu0 0.0
    %116 = vmatprep.subr.mxu0 0.0
    %117 = vmatpush1.msra.mxu0 0.0
    %118 = vmatprep.subr.mxu0 0.0
    %119 = vmatpush1.msra.mxu0 0.0
    %120 = vmatprep.subr.mxu0 0.0
    %121 = vmatpush1.msra.mxu0 0.0
    %122 = vmatprep.subr.mxu0 0.0
    %123 = vmatpush1.msra.mxu0 %v82
    %124 = vmatprep.subr.mxu0 0.0
    %125 = vmatpush1.msra.mxu0 %v81
    %126 = vmatprep.subr.mxu0 0.0
    %127 = vmatpush2.msra.mxu0 0.0
    %128 = vmatprep.subr.mxu0 0.0
    %129 = vmatpush2.msra.mxu0 0.0
    %130 = vmatprep.subr.mxu0 0.0
    %131 = vmatpush2.msra.mxu0 0.0
    %132 = vmatprep.subr.mxu0 0.0
    %133 = vmatpush2.msra.mxu0 0.0
    %134 = vmatprep.subr.mxu0 0.0
    %135 = vmatpush2.msra.mxu0 0.0
    %136 = vmatprep.subr.mxu0 0.0
    %137 = vmatpush2.msra.mxu0 0.0
    %138 = vmatprep.subr.mxu0 0.0
    %139 = vmatpush2.msra.mxu0 0.0
    %140 = vmatprep.subr.mxu0 0.0
    %141 = vmatpush2.msra.mxu0 0.0
    %142 = vmatprep.subr.mxu0 0.0
    %143 = vmatpush2.msra.mxu0 0.0
    %144 = vmatprep.subr.mxu0 0.0
    %145 = vmatpush2.msra.mxu0 0.0
    %146 = vmatprep.subr.mxu0 0.0
    %147 = vmatpush2.msra.mxu0 0.0
    %148 = vmatprep.subr.mxu0 0.0
    %149 = vmatpush2.msra.mxu0 0.0
    %150 = vmatprep.subr.mxu0 0.0
    %151 = vmatpush2.msra.mxu0 0.0
    %152 = vmatprep.subr.mxu0 0.0
    %153 = vmatpush2.msra.mxu0 0.0
    %154 = vmatprep.subr.mxu0 0.0
    %155 = vmatpush2.msra.mxu0 0.0
    %156 = vmatprep.subr.mxu0 0.0
    %157 = vmatpush2.msra.mxu0 0.0
    %158 = vmatprep.mubr.f32.mxu0 0.0
    %159 = vmatmul.mubr.f32.gmra.mxu0 %v92
    %v160 = vpop.f32.mrf.mxu0
    %v161 = vadd.f32 %v88, %v160
    %v162 = vpop.f32.mrf.mxu0
    %163 = vdwg.mxu0
    %v164 = vmax.f32 %v161, 0.0
    %v165 = vld [vmem:[#allocation7] sm:$0xff]
    %v166 = vld [vmem:[#allocation7 + $0x8] sm:$0xff]
    %v167 = vld [vmem:[#allocation7 + $0x10] sm:$0xff]
    %v168 = vld [vmem:[#allocation7 + $0x18] sm:$0xff]
    %v169 = vld [vmem:[%s4] sm:$0x1]
    %v171 = vlaneseq
    %v172 = vshrl.u32 %v171, 7
    %v173 = vsub.s32 0, %v172
    %v174 = vrot.slane %v169, %v173
    %vm176 = vcmask 261120
    %v178 = vsel %vm176, %v164, 0
    %180 = vmatprep.subr.mxu0 0.0
    %181 = vmatpush1.msra.mxu0 0.0
    %182 = vmatprep.subr.mxu0 0.0
    %183 = vmatpush1.msra.mxu0 0.0
    %184 = vmatprep.subr.mxu0 0.0
    %185 = vmatpush1.msra.mxu0 0.0
    %186 = vmatprep.subr.mxu0 0.0
    %187 = vmatpush1.msra.mxu0 0.0
    %188 = vmatprep.subr.mxu0 0.0
    %189 = vmatpush1.msra.mxu0 0.0
    %190 = vmatprep.subr.mxu0 0.0
    %191 = vmatpush1.msra.mxu0 0.0
    %192 = vmatprep.subr.mxu0 0.0
    %193 = vmatpush1.msra.mxu0 0.0
    %194 = vmatprep.subr.mxu0 0.0
    %195 = vmatpush1.msra.mxu0 0.0
    %196 = vmatprep.subr.mxu0 0.0
    %197 = vmatpush1.msra.mxu0 0.0
    %198 = vmatprep.subr.mxu0 0.0
    %199 = vmatpush1.msra.mxu0 0.0
    %200 = vmatprep.subr.mxu0 0.0
    %201 = vmatpush1.msra.mxu0 0.0
    %202 = vmatprep.subr.mxu0 0.0
    %203 = vmatpush1.msra.mxu0 0.0
    %204 = vmatprep.subr.mxu0 0.0
    %205 = vmatpush1.msra.mxu0 %v168
    %206 = vmatprep.subr.mxu0 0.0
    %207 = vmatpush1.msra.mxu0 %v167
    %208 = vmatprep.subr.mxu0 0.0
    %209 = vmatpush1.msra.mxu0 %v166
    %210 = vmatprep.subr.mxu0 0.0
    %211 = vmatpush1.msra.mxu0 %v165
    %212 = vmatprep.subr.mxu0 0.0
    %213 = vmatpush2.msra.mxu0 0.0
    %214 = vmatprep.subr.mxu0 0.0
    %215 = vmatpush2.msra.mxu0 0.0
    %216 = vmatprep.subr.mxu0 0.0
    %217 = vmatpush2.msra.mxu0 0.0
    %218 = vmatprep.subr.mxu0 0.0
    %219 = vmatpush2.msra.mxu0 0.0
    %220 = vmatprep.subr.mxu0 0.0
    %221 = vmatpush2.msra.mxu0 0.0
    %222 = vmatprep.subr.mxu0 0.0
    %223 = vmatpush2.msra.mxu0 0.0
    %224 = vmatprep.subr.mxu0 0.0
    %225 = vmatpush2.msra.mxu0 0.0
    %226 = vmatprep.subr.mxu0 0.0
    %227 = vmatpush2.msra.mxu0 0.0
    %228 = vmatprep.subr.mxu0 0.0
    %229 = vmatpush2.msra.mxu0 0.0
    %230 = vmatprep.subr.mxu0 0.0
    %231 = vmatpush2.msra.mxu0 0.0
    %232 = vmatprep.subr.mxu0 0.0
    %233 = vmatpush2.msra.mxu0 0.0
    %234 = vmatprep.subr.mxu0 0.0
    %235 = vmatpush2.msra.mxu0 0.0
    %236 = vmatprep.subr.mxu0 0.0
    %237 = vmatpush2.msra.mxu0 0.0
    %238 = vmatprep.subr.mxu0 0.0
    %239 = vmatpush2.msra.mxu0 0.0
    %240 = vmatprep.subr.mxu0 0.0
    %241 = vmatpush2.msra.mxu0 0.0
    %242 = vmatprep.subr.mxu0 0.0
    %243 = vmatpush2.msra.mxu0 0.0
    %244 = vmatprep.mubr.f32.mxu0 0.0
    %245 = vmatmul.mubr.f32.gmra.mxu0 %v178
    %v246 = vpop.f32.mrf.mxu0
    %v247 = vadd.f32 %v174, %v246
    %v248 = vpop.f32.mrf.mxu0
    %249 = vdwg.mxu0
    %v250 = vmax.f32 %v247, 0.0
    %v251 = vld [vmem:[#allocation8] sm:$0xff]
    %v252 = vld [vmem:[#allocation8 + $0x8] sm:$0xff]
    %v253 = vld [vmem:[#allocation8 + $0x10] sm:$0xff]
    %v254 = vld [vmem:[#allocation8 + $0x18] sm:$0xff]
    %v255 = vld [vmem:[%s6] sm:$0x1]
    %v257 = vlaneseq
    %v258 = vshrl.u32 %v257, 7
    %v259 = vsub.s32 0, %v258
    %v260 = vrot.slane %v255, %v259
    %v263 = vsel %vm176, %v250, 0
    %265 = vmatprep.subr.mxu0 0.0
    %266 = vmatpush1.msra.mxu0 0.0
    %267 = vmatprep.subr.mxu0 0.0
    %268 = vmatpush1.msra.mxu0 0.0
    %269 = vmatprep.subr.mxu0 0.0
    %270 = vmatpush1.msra.mxu0 0.0
    %271 = vmatprep.subr.mxu0 0.0
    %272 = vmatpush1.msra.mxu0 0.0
    %273 = vmatprep.subr.mxu0 0.0
    %274 = vmatpush1.msra.mxu0 0.0
    %275 = vmatprep.subr.mxu0 0.0
    %276 = vmatpush1.msra.mxu0 0.0
    %277 = vmatprep.subr.mxu0 0.0
    %278 = vmatpush1.msra.mxu0 0.0
    %279 = vmatprep.subr.mxu0 0.0
    %280 = vmatpush1.msra.mxu0 0.0
    %281 = vmatprep.subr.mxu0 0.0
    %282 = vmatpush1.msra.mxu0 0.0
    %283 = vmatprep.subr.mxu0 0.0
    %284 = vmatpush1.msra.mxu0 0.0
    %285 = vmatprep.subr.mxu0 0.0
    %286 = vmatpush1.msra.mxu0 0.0
    %287 = vmatprep.subr.mxu0 0.0
    %288 = vmatpush1.msra.mxu0 0.0
    %289 = vmatprep.subr.mxu0 0.0
    %290 = vmatpush1.msra.mxu0 %v254
    %291 = vmatprep.subr.mxu0 0.0
    %292 = vmatpush1.msra.mxu0 %v253
    %293 = vmatprep.subr.mxu0 0.0
    %294 = vmatpush1.msra.mxu0 %v252
    %295 = vmatprep.subr.mxu0 0.0
    %296 = vmatpush1.msra.mxu0 %v251
    %297 = vmatprep.subr.mxu0 0.0
    %298 = vmatpush2.msra.mxu0 0.0
    %299 = vmatprep.subr.mxu0 0.0
    %300 = vmatpush2.msra.mxu0 0.0
    %301 = vmatprep.subr.mxu0 0.0
    %302 = vmatpush2.msra.mxu0 0.0
    %303 = vmatprep.subr.mxu0 0.0
    %304 = vmatpush2.msra.mxu0 0.0
    %305 = vmatprep.subr.mxu0 0.0
    %306 = vmatpush2.msra.mxu0 0.0
    %307 = vmatprep.subr.mxu0 0.0
    %308 = vmatpush2.msra.mxu0 0.0
    %309 = vmatprep.subr.mxu0 0.0
    %310 = vmatpush2.msra.mxu0 0.0
    %311 = vmatprep.subr.mxu0 0.0
    %312 = vmatpush2.msra.mxu0 0.0
    %313 = vmatprep.subr.mxu0 0.0
    %314 = vmatpush2.msra.mxu0 0.0
    %315 = vmatprep.subr.mxu0 0.0
    %316 = vmatpush2.msra.mxu0 0.0
    %317 = vmatprep.subr.mxu0 0.0
    %318 = vmatpush2.msra.mxu0 0.0
    %319 = vmatprep.subr.mxu0 0.0
    %320 = vmatpush2.msra.mxu0 0.0
    %321 = vmatprep.subr.mxu0 0.0
    %322 = vmatpush2.msra.mxu0 0.0
    %323 = vmatprep.subr.mxu0 0.0
    %324 = vmatpush2.msra.mxu0 0.0
    %325 = vmatprep.subr.mxu0 0.0
    %326 = vmatpush2.msra.mxu0 0.0
    %327 = vmatprep.subr.mxu0 0.0
    %328 = vmatpush2.msra.mxu0 0.0
    %329 = vmatprep.mubr.f32.mxu0 0.0
    %330 = vmatmul.mubr.f32.gmra.mxu0 %v263
    %v331 = vpop.f32.mrf.mxu0
    %v332 = vadd.f32 %v260, %v331
    %v333 = vpop.f32.mrf.mxu0
    %334 = vdwg.mxu0
    %335 = vst [vmem:[#allocation10] sm:$0xff] %v332
    // Predicated region
    $region46: #{tpu_custom_call.1} parent=1 // pred_check
      _
    $region47: #{tpu_custom_call.1} parent=1 // pred_check_branch
      %337 = sbr.rel (0) target = $region49
    $region48: #{tpu_custom_call.1} parent=1 // pred_region
      %s339 = ssub.s32 128, 128
      %340 = vsyncadd [#allocation4], %s339
      %s342 = sshll.u32 [#allocation10], 4
      %s343 = int_to_ptr.vmem [resolvable:$true] %s342
      %345 = dma.vmem_to_hbm [thread:$0]  %s343, 128, %s7, [#allocation4]
    $region49: #{tpu_custom_call.1} parent=1 // pred_fallthru
      _
    // Predicated region
    $region50: #{tpu_custom_call.1} parent=1 // pred_check
      _
    $region51: #{tpu_custom_call.1} parent=1 // pred_check_branch
      %347 = sbr.rel (0) target = $region53
    $region52: #{tpu_custom_call.1} parent=1 // pred_region
      %348 = dma.done [#allocation4], 128
    $region53: #{tpu_custom_call.1} parent=1 // pred_fallthru
      _
    %349 = vsyncpa [#allocation3], 1
    %350 = vsyncpa [#allocation6], 1
    %351 = vsyncpa [#allocation9], 1
    %352 = vsyncpa [#allocation4], 1

// kernel: tpu_custom_call.1
$region0: #{tpu_custom_call.1}
  #allocation0 [shape = 'u32[]', space=smem, size = 0x4, offset = 0x4, fixed_abs, tag = 'smem constant byte address 0x4 - core index']
  #allocation1 [shape = 'u32[144,128]{1,0:T(1,128)}', space=vmem, size = 0x12000, scoped, tag = 'internal scratch']
  %s0 = inlined_call_operand.hbm [shape: f32[8,16], index: 0, kind: input, shape index: {}]
  %s1 = inlined_call_operand.hbm [shape: f32[16,32], index: 1, kind: input, shape index: {}]
  %s2 = inlined_call_operand.vmem [shape: f32[1,32], index: 2, kind: input, shape index: {}]
  %s3 = inlined_call_operand.hbm [shape: f32[32,32], index: 3, kind: input, shape index: {}]
  %s4 = inlined_call_operand.vmem [shape: f32[1,32], index: 4, kind: input, shape index: {}]
  %s5 = inlined_call_operand.hbm [shape: f32[32,128], index: 5, kind: input, shape index: {}]
  %s6 = inlined_call_operand.vmem [shape: f32[1,128], index: 6, kind: input, shape index: {}]
  %s7 = inlined_call_operand.hbm [shape: f32[8,128], index: 7, kind: output, shape index: {}]
  %s8 = sld [smem:[#allocation0]]
  $region54: #{tpu_custom_call.1} parent=0
    _
  %s10 = ssub.s32 1, %s8
  %s11 = scalar_select 0, %s10, %s8
  $region1: #{tpu_custom_call.1} parent=0
    #allocation2 [shape = 'u8[4096]{0}', space=vmem, size = 0x1000, scoped, tag = 'input window, operand 0, single buffered']
    #allocation3 [shape = 's32[1]{0}', space=sflag, size = 0x4, scoped, tag = 'scoped memory for tpu_custom_call.1']
    #allocation4 [shape = 's32[1]{0}', space=sflag, size = 0x4, scoped, tag = 'scoped memory for tpu_custom_call.1']
    #allocation5 [shape = 'u8[8192]{0}', space=vmem, size = 0x2000, scoped, tag = 'input window, operand 1, single buffered']
    #allocation6 [shape = 's32[1]{0}', space=sflag, size = 0x4, scoped, tag = 'scoped memory for tpu_custom_call.1']
    #allocation7 [shape = 'u8[16384]{0}', space=vmem, size = 0x4000, scoped, tag = 'input window, operand 3, single buffered']
    #allocation8 [shape = 'u8[16384]{0}', space=vmem, size = 0x4000, scoped, tag = 'input window, operand 5, single buffered']
    #allocation9 [shape = 's32[1]{0}', space=sflag, size = 0x4, scoped, tag = 'scoped memory for tpu_custom_call.1']
    #allocation10 [shape = 'u8[4096]{0}', space=vmem, size = 0x1000, scoped, tag = 'output window, operand 0, single buffered']
    %12 = vsyncpa [#allocation3], 0
    %13 = vsyncpa [#allocation6], 0
    %14 = vsyncpa [#allocation9], 0
    %15 = vsyncpa [#allocation4], 0
    // Predicated region
    $region2: #{tpu_custom_call.1} parent=1 // pred_check
      _
    $region3: #{tpu_custom_call.1} parent=1 // pred_check_branch
      %17 = sbr.rel (0) target = $region5
    $region4: #{tpu_custom_call.1} parent=1 // pred_region
      %s19 = ssub.s32 128, 128
      %20 = vsyncadd [#allocation3], %s19
      %s22 = sshll.u32 [#allocation2], 4
      %s23 = int_to_ptr.vmem [resolvable:$true] %s22
      %25 = dma.hbm_to_vmem [thread:$0]  %s0, 128, %s23, [#allocation3]
    $region5: #{tpu_custom_call.1} parent=1 // pred_fallthru
      _
    // Predicated region
    $region6: #{tpu_custom_call.1} parent=1 // pred_check
      _
    $region7: #{tpu_custom_call.1} parent=1 // pred_check_branch
      %27 = sbr.rel (0) target = $region9
    $region8: #{tpu_custom_call.1} parent=1 // pred_region
      %s29 = ssub.s32 256, 256
      %30 = vsyncadd [#allocation6], %s29
      %s31 = sshll.u32 [#allocation5], 4
      %s32 = int_to_ptr.vmem [resolvable:$true] %s31
      %37 = dma.hbm_to_vmem [thread:$0]  %s1, 256, %s32, [#allocation6], 128, 128, 8
    $region9: #{tpu_custom_call.1} parent=1 // pred_fallthru
      _
    // Predicated region
    $region10: #{tpu_custom_call.1} parent=1 // pred_check
      _
    $region11: #{tpu_custom_call.1} parent=1 // pred_check_branch
      %39 = sbr.rel (0) target = $region13
    $region12: #{tpu_custom_call.1} parent=1 // pred_region
      _
    $region13: #{tpu_custom_call.1} parent=1 // pred_fallthru
      _
    // Predicated region
    $region14: #{tpu_custom_call.1} parent=1 // pred_check
      _
    $region15: #{tpu_custom_call.1} parent=1 // pred_check_branch
      %41 = sbr.rel (0) target = $region17
    $region16: #{tpu_custom_call.1} parent=1 // pred_region
      %s43 = ssub.s32 512, 512
      %44 = vsyncadd [#allocation6], %s43
      %s45 = sshll.u32 [#allocation7], 4
      %s46 = int_to_ptr.vmem [resolvable:$true] %s45
      %51 = dma.hbm_to_vmem [thread:$0]  %s3, 512, %s46, [#allocation6], 128, 128, 8
    $region17: #{tpu_custom_call.1} parent=1 // pred_fallthru
      _
    // Predicated region
    $region18: #{tpu_custom_call.1} parent=1 // pred_check
      _
    $region19: #{tpu_custom_call.1} parent=1 // pred_check_branch
      %53 = sbr.rel (0) target = $region21
    $region20: #{tpu_custom_call.1} parent=1 // pred_region
      _
    $region21: #{tpu_custom_call.1} parent=1 // pred_fallthru
      _
    // Predicated region
    $region22: #{tpu_custom_call.1} parent=1 // pred_check
      _
    $region23: #{tpu_custom_call.1} parent=1 // pred_check_branch
      %55 = sbr.rel (0) target = $region25
    $region24: #{tpu_custom_call.1} parent=1 // pred_region
      %s57 = ssub.s32 512, 512
      %58 = vsyncadd [#allocation9], %s57
      %s59 = sshll.u32 [#allocation8], 4
      %s60 = int_to_ptr.vmem [resolvable:$true] %s59
      %65 = dma.hbm_to_vmem [thread:$0]  %s5, 512, %s60, [#allocation9], 128, 128, 8
    $region25: #{tpu_custom_call.1} parent=1 // pred_fallthru
      _
    // Predicated region
    $region26: #{tpu_custom_call.1} parent=1 // pred_check
      _
    $region27: #{tpu_custom_call.1} parent=1 // pred_check_branch
      %67 = sbr.rel (0) target = $region29
    $region28: #{tpu_custom_call.1} parent=1 // pred_region
      _
    $region29: #{tpu_custom_call.1} parent=1 // pred_fallthru
      _
    // Predicated region
    $region30: #{tpu_custom_call.1} parent=1 // pred_check
      _
    $region31: #{tpu_custom_call.1} parent=1 // pred_check_branch
      %69 = sbr.rel (0) target = $region33
    $region32: #{tpu_custom_call.1} parent=1 // pred_region
      %70 = dma.done [#allocation3], 128
    $region33: #{tpu_custom_call.1} parent=1 // pred_fallthru
      _
    // Predicated region
    $region34: #{tpu_custom_call.1} parent=1 // pred_check
      _
    $region35: #{tpu_custom_call.1} parent=1 // pred_check_branch
      %72 = sbr.rel (0) target = $region37
    $region36: #{tpu_custom_call.1} parent=1 // pred_region
      %73 = dma.done [#allocation6], 256
    $region37: #{tpu_custom_call.1} parent=1 // pred_fallthru
      _
    // Predicated region
    $region38: #{tpu_custom_call.1} parent=1 // pred_check
      _
    $region39: #{tpu_custom_call.1} parent=1 // pred_check_branch
      %75 = sbr.rel (0) target = $region41
    $region40: #{tpu_custom_call.1} parent=1 // pred_region
      %76 = dma.done [#allocation6], 512
    $region41: #{tpu_custom_call.1} parent=1 // pred_fallthru
      _
    // Predicated region
    $region42: #{tpu_custom_call.1} parent=1 // pred_check
      _
    $region43: #{tpu_custom_call.1} parent=1 // pred_check_branch
      %78 = sbr.rel (0) target = $region45
    $region44: #{tpu_custom_call.1} parent=1 // pred_region
      %79 = dma.done [#allocation9], 512
    $region45: #{tpu_custom_call.1} parent=1 // pred_fallthru
      _
    %v80 = vld [vmem:[#allocation2] sm:$0xff]
    %v81 = vld [vmem:[#allocation5] sm:$0xff]
    %v82 = vld [vmem:[#allocation5 + $0x8] sm:$0xff]
    %v83 = vld [vmem:[%s2] sm:$0x1]
    %v85 = vlaneseq
    %v86 = vshrl.u32 %v85, 7
    %v87 = vsub.s32 0, %v86
    %v88 = vrot.slane %v83, %v87
    %vm90 = vcmask 130048
    %v92 = vsel %vm90, %v80, 0
    %94 = vmatprep.subr.mxu0 0.0
    %95 = vmatpush1.msra.mxu0 0.0
    %96 = vmatprep.subr.mxu0 0.0
    %97 = vmatpush1.msra.mxu0 0.0
    %98 = vmatprep.subr.mxu0 0.0
    %99 = vmatpush1.msra.mxu0 0.0
    %100 = vmatprep.subr.mxu0 0.0
    %101 = vmatpush1.msra.mxu0 0.0
    %102 = vmatprep.subr.mxu0 0.0
    %103 = vmatpush1.msra.mxu0 0.0
    %104 = vmatprep.subr.mxu0 0.0
    %105 = vmatpush1.msra.mxu0 0.0
    %106 = vmatprep.subr.mxu0 0.0
    %107 = vmatpush1.msra.mxu0 0.0
    %108 = vmatprep.subr.mxu0 0.0
    %109 = vmatpush1.msra.mxu0 0.0
    %110 = vmatprep.subr.mxu0 0.0
    %111 = vmatpush1.msra.mxu0 0.0
    %112 = vmatprep.subr.mxu0 0.0
    %113 = vmatpush1.msra.mxu0 0.0
    %114 = vmatprep.subr.mxu0 0.0
    %115 = vmatpush1.msra.mxu0 0.0
    %116 = vmatprep.subr.mxu0 0.0
    %117 = vmatpush1.msra.mxu0 0.0
    %118 = vmatprep.subr.mxu0 0.0
    %119 = vmatpush1.msra.mxu0 0.0
    %120 = vmatprep.subr.mxu0 0.0
    %121 = vmatpush1.msra.mxu0 0.0
    %122 = vmatprep.subr.mxu0 0.0
    %123 = vmatpush1.msra.mxu0 %v82
    %124 = vmatprep.subr.mxu0 0.0
    %125 = vmatpush1.msra.mxu0 %v81
    %126 = vmatprep.subr.mxu0 0.0
    %127 = vmatpush2.msra.mxu0 0.0
    %128 = vmatprep.subr.mxu0 0.0
    %129 = vmatpush2.msra.mxu0 0.0
    %130 = vmatprep.subr.mxu0 0.0
    %131 = vmatpush2.msra.mxu0 0.0
    %132 = vmatprep.subr.mxu0 0.0
    %133 = vmatpush2.msra.mxu0 0.0
    %134 = vmatprep.subr.mxu0 0.0
    %135 = vmatpush2.msra.mxu0 0.0
    %136 = vmatprep.subr.mxu0 0.0
    %137 = vmatpush2.msra.mxu0 0.0
    %138 = vmatprep.subr.mxu0 0.0
    %139 = vmatpush2.msra.mxu0 0.0
    %140 = vmatprep.subr.mxu0 0.0
    %141 = vmatpush2.msra.mxu0 0.0
    %142 = vmatprep.subr.mxu0 0.0
    %143 = vmatpush2.msra.mxu0 0.0
    %144 = vmatprep.subr.mxu0 0.0
    %145 = vmatpush2.msra.mxu0 0.0
    %146 = vmatprep.subr.mxu0 0.0
    %147 = vmatpush2.msra.mxu0 0.0
    %148 = vmatprep.subr.mxu0 0.0
    %149 = vmatpush2.msra.mxu0 0.0
    %150 = vmatprep.subr.mxu0 0.0
    %151 = vmatpush2.msra.mxu0 0.0
    %152 = vmatprep.subr.mxu0 0.0
    %153 = vmatpush2.msra.mxu0 0.0
    %154 = vmatprep.subr.mxu0 0.0
    %155 = vmatpush2.msra.mxu0 0.0
    %156 = vmatprep.subr.mxu0 0.0
    %157 = vmatpush2.msra.mxu0 0.0
    %158 = vmatprep.mubr.f32.mxu0 0.0
    %159 = vmatmul.mubr.f32.gmra.mxu0 %v92
    %v160 = vpop.f32.mrf.mxu0
    %v161 = vadd.f32 %v88, %v160
    %v162 = vpop.f32.mrf.mxu0
    %163 = vdwg.mxu0
    %v164 = vmax.f32 %v161, 0.0
    %v165 = vld [vmem:[#allocation7] sm:$0xff]
    %v166 = vld [vmem:[#allocation7 + $0x8] sm:$0xff]
    %v167 = vld [vmem:[#allocation7 + $0x10] sm:$0xff]
    %v168 = vld [vmem:[#allocation7 + $0x18] sm:$0xff]
    %v169 = vld [vmem:[%s4] sm:$0x1]
    %v171 = vlaneseq
    %v172 = vshrl.u32 %v171, 7
    %v173 = vsub.s32 0, %v172
    %v174 = vrot.slane %v169, %v173
    %vm176 = vcmask 261120
    %v178 = vsel %vm176, %v164, 0
    %180 = vmatprep.subr.mxu0 0.0
    %181 = vmatpush1.msra.mxu0 0.0
    %182 = vmatprep.subr.mxu0 0.0
    %183 = vmatpush1.msra.mxu0 0.0
    %184 = vmatprep.subr.mxu0 0.0
    %185 = vmatpush1.msra.mxu0 0.0
    %186 = vmatprep.subr.mxu0 0.0
    %187 = vmatpush1.msra.mxu0 0.0
    %188 = vmatprep.subr.mxu0 0.0
    %189 = vmatpush1.msra.mxu0 0.0
    %190 = vmatprep.subr.mxu0 0.0
    %191 = vmatpush1.msra.mxu0 0.0
    %192 = vmatprep.subr.mxu0 0.0
    %193 = vmatpush1.msra.mxu0 0.0
    %194 = vmatprep.subr.mxu0 0.0
    %195 = vmatpush1.msra.mxu0 0.0
    %196 = vmatprep.subr.mxu0 0.0
    %197 = vmatpush1.msra.mxu0 0.0
    %198 = vmatprep.subr.mxu0 0.0
    %199 = vmatpush1.msra.mxu0 0.0
    %200 = vmatprep.subr.mxu0 0.0
    %201 = vmatpush1.msra.mxu0 0.0
    %202 = vmatprep.subr.mxu0 0.0
    %203 = vmatpush1.msra.mxu0 0.0
    %204 = vmatprep.subr.mxu0 0.0
    %205 = vmatpush1.msra.mxu0 %v168
    %206 = vmatprep.subr.mxu0 0.0
    %207 = vmatpush1.msra.mxu0 %v167
    %208 = vmatprep.subr.mxu0 0.0
    %209 = vmatpush1.msra.mxu0 %v166
    %210 = vmatprep.subr.mxu0 0.0
    %211 = vmatpush1.msra.mxu0 %v165
    %212 = vmatprep.subr.mxu0 0.0
    %213 = vmatpush2.msra.mxu0 0.0
    %214 = vmatprep.subr.mxu0 0.0
    %215 = vmatpush2.msra.mxu0 0.0
    %216 = vmatprep.subr.mxu0 0.0
    %217 = vmatpush2.msra.mxu0 0.0
    %218 = vmatprep.subr.mxu0 0.0
    %219 = vmatpush2.msra.mxu0 0.0
    %220 = vmatprep.subr.mxu0 0.0
    %221 = vmatpush2.msra.mxu0 0.0
    %222 = vmatprep.subr.mxu0 0.0
    %223 = vmatpush2.msra.mxu0 0.0
    %224 = vmatprep.subr.mxu0 0.0
    %225 = vmatpush2.msra.mxu0 0.0
    %226 = vmatprep.subr.mxu0 0.0
    %227 = vmatpush2.msra.mxu0 0.0
    %228 = vmatprep.subr.mxu0 0.0
    %229 = vmatpush2.msra.mxu0 0.0
    %230 = vmatprep.subr.mxu0 0.0
    %231 = vmatpush2.msra.mxu0 0.0
    %232 = vmatprep.subr.mxu0 0.0
    %233 = vmatpush2.msra.mxu0 0.0
    %234 = vmatprep.subr.mxu0 0.0
    %235 = vmatpush2.msra.mxu0 0.0
    %236 = vmatprep.subr.mxu0 0.0
    %237 = vmatpush2.msra.mxu0 0.0
    %238 = vmatprep.subr.mxu0 0.0
    %239 = vmatpush2.msra.mxu0 0.0
    %240 = vmatprep.subr.mxu0 0.0
    %241 = vmatpush2.msra.mxu0 0.0
    %242 = vmatprep.subr.mxu0 0.0
    %243 = vmatpush2.msra.mxu0 0.0
    %244 = vmatprep.mubr.f32.mxu0 0.0
    %245 = vmatmul.mubr.f32.gmra.mxu0 %v178
    %v246 = vpop.f32.mrf.mxu0
    %v247 = vadd.f32 %v174, %v246
    %v248 = vpop.f32.mrf.mxu0
    %249 = vdwg.mxu0
    %v250 = vmax.f32 %v247, 0.0
    %v251 = vld [vmem:[#allocation8] sm:$0xff]
    %v252 = vld [vmem:[#allocation8 + $0x8] sm:$0xff]
    %v253 = vld [vmem:[#allocation8 + $0x10] sm:$0xff]
    %v254 = vld [vmem:[#allocation8 + $0x18] sm:$0xff]
    %v255 = vld [vmem:[%s6] sm:$0x1]
    %v257 = vlaneseq
    %v258 = vshrl.u32 %v257, 7
    %v259 = vsub.s32 0, %v258
    %v260 = vrot.slane %v255, %v259
    %v263 = vsel %vm176, %v250, 0
    %265 = vmatprep.subr.mxu0 0.0
    %266 = vmatpush1.msra.mxu0 0.0
    %267 = vmatprep.subr.mxu0 0.0
    %268 = vmatpush1.msra.mxu0 0.0
    %269 = vmatprep.subr.mxu0 0.0
    %270 = vmatpush1.msra.mxu0 0.0
    %271 = vmatprep.subr.mxu0 0.0
    %272 = vmatpush1.msra.mxu0 0.0
    %273 = vmatprep.subr.mxu0 0.0
    %274 = vmatpush1.msra.mxu0 0.0
    %275 = vmatprep.subr.mxu0 0.0
    %276 = vmatpush1.msra.mxu0 0.0
    %277 = vmatprep.subr.mxu0 0.0
    %278 = vmatpush1.msra.mxu0 0.0
    %279 = vmatprep.subr.mxu0 0.0
    %280 = vmatpush1.msra.mxu0 0.0
    %281 = vmatprep.subr.mxu0 0.0
    %282 = vmatpush1.msra.mxu0 0.0
    %283 = vmatprep.subr.mxu0 0.0
    %284 = vmatpush1.msra.mxu0 0.0
    %285 = vmatprep.subr.mxu0 0.0
    %286 = vmatpush1.msra.mxu0 0.0
    %287 = vmatprep.subr.mxu0 0.0
    %288 = vmatpush1.msra.mxu0 0.0
    %289 = vmatprep.subr.mxu0 0.0
    %290 = vmatpush1.msra.mxu0 %v254
    %291 = vmatprep.subr.mxu0 0.0
    %292 = vmatpush1.msra.mxu0 %v253
    %293 = vmatprep.subr.mxu0 0.0
    %294 = vmatpush1.msra.mxu0 %v252
    %295 = vmatprep.subr.mxu0 0.0
    %296 = vmatpush1.msra.mxu0 %v251
    %297 = vmatprep.subr.mxu0 0.0
    %298 = vmatpush2.msra.mxu0 0.0
    %299 = vmatprep.subr.mxu0 0.0
    %300 = vmatpush2.msra.mxu0 0.0
    %301 = vmatprep.subr.mxu0 0.0
    %302 = vmatpush2.msra.mxu0 0.0
    %303 = vmatprep.subr.mxu0 0.0
    %304 = vmatpush2.msra.mxu0 0.0
    %305 = vmatprep.subr.mxu0 0.0
    %306 = vmatpush2.msra.mxu0 0.0
    %307 = vmatprep.subr.mxu0 0.0
    %308 = vmatpush2.msra.mxu0 0.0
    %309 = vmatprep.subr.mxu0 0.0
    %310 = vmatpush2.msra.mxu0 0.0
    %311 = vmatprep.subr.mxu0 0.0
    %312 = vmatpush2.msra.mxu0 0.0
    %313 = vmatprep.subr.mxu0 0.0
    %314 = vmatpush2.msra.mxu0 0.0
    %315 = vmatprep.subr.mxu0 0.0
    %316 = vmatpush2.msra.mxu0 0.0
    %317 = vmatprep.subr.mxu0 0.0
    %318 = vmatpush2.msra.mxu0 0.0
    %319 = vmatprep.subr.mxu0 0.0
    %320 = vmatpush2.msra.mxu0 0.0
    %321 = vmatprep.subr.mxu0 0.0
    %322 = vmatpush2.msra.mxu0 0.0
    %323 = vmatprep.subr.mxu0 0.0
    %324 = vmatpush2.msra.mxu0 0.0
    %325 = vmatprep.subr.mxu0 0.0
    %326 = vmatpush2.msra.mxu0 0.0
    %327 = vmatprep.subr.mxu0 0.0
    %328 = vmatpush2.msra.mxu0 0.0
    %329 = vmatprep.mubr.f32.mxu0 0.0
    %330 = vmatmul.mubr.f32.gmra.mxu0 %v263
    %v331 = vpop.f32.mrf.mxu0
    %v332 = vadd.f32 %v260, %v331
    %v333 = vpop.f32.mrf.mxu0
    %334 = vdwg.mxu0
    %335 = vst [vmem:[#allocation10] sm:$0xff] %v332
    // Predicated region
    $region46: #{tpu_custom_call.1} parent=1 // pred_check
      _
    $region47: #{tpu_custom_call.1} parent=1 // pred_check_branch
      %337 = sbr.rel (0) target = $region49
    $region48: #{tpu_custom_call.1} parent=1 // pred_region
      %s339 = ssub.s32 128, 128
      %340 = vsyncadd [#allocation4], %s339
      %s342 = sshll.u32 [#allocation10], 4
      %s343 = int_to_ptr.vmem [resolvable:$true] %s342
      %345 = dma.vmem_to_hbm [thread:$0]  %s343, 128, %s7, [#allocation4]
    $region49: #{tpu_custom_call.1} parent=1 // pred_fallthru
      _
    // Predicated region
    $region50: #{tpu_custom_call.1} parent=1 // pred_check
      _
    $region51: #{tpu_custom_call.1} parent=1 // pred_check_branch
      %347 = sbr.rel (0) target = $region53
    $region52: #{tpu_custom_call.1} parent=1 // pred_region
      %348 = dma.done [#allocation4], 128
    $region53: #{tpu_custom_call.1} parent=1 // pred_fallthru
      _
    %349 = vsyncpa [#allocation3], 1
    %350 = vsyncpa [#allocation6], 1
    %351 = vsyncpa [#allocation9], 1
    %352 = vsyncpa [#allocation4], 1

</llo_original>
